<compile_context>
chip_gen: v6e
topology: v6e:2x2x1
jax: 0.10.0
libtpu: 0.0.40
codegen_flags: <defaults>
</compile_context>

<pallas_src>
import jax
import jax.numpy as jnp
from jax.experimental import pallas as pl
from jax.experimental.pallas import tpu as pltpu

EPS = 1e-10                                # matches L1Norm.eps
BLOCK_BYTE_BUDGET = 2 * 1024 * 1024        # ~2 MiB input block: >=85% HBM roofline per tile sweeps
MAX_FULLDIM_BLOCK_BYTES = 4 * 1024 * 1024  # beyond this a full-reduced-dim block is tiled instead
VMEM_LIMIT_BYTES = 32 * 1024 * 1024        # raise v5e's 16 MiB default; == default on v6e/v7x


def _round_up(n, m):
    return ((n + m - 1) // m) * m


def _params(dimension_semantics):
    return pltpu.CompilerParams(dimension_semantics=dimension_semantics,
                                vmem_limit_bytes=VMEM_LIMIT_BYTES)


# --------------------------------------------------------------------------- kernels
def _rows_kernel(x_ref, o_ref):
    # x_ref/o_ref: (tm, D) tiles; reduced axis (D) on lanes -> XLU row-reduce.
    x = x_ref[...].astype(jnp.float32)                          # f32 accumulate for any input dtype
    norm = jnp.sum(jnp.abs(x), axis=-1, keepdims=True) + EPS    # (tm, 1)
    inv = pl.reciprocal(norm, approx=False)                     # exact divide (one per row)
    o_ref[...] = (x * inv).astype(o_ref.dtype)                  # VPU broadcast multiply, lane-dense vst


def _channels_kernel(x_ref, o_ref):
    # x_ref/o_ref: (1, C, ts) tiles in native NCHW-style layout; reduce over C (sublane axis).
    x = x_ref[...].astype(jnp.float32)
    norm = jnp.sum(jnp.abs(x), axis=1, keepdims=True) + EPS     # (1, 1, ts)
    o_ref[...] = (x * pl.reciprocal(norm, approx=False)).astype(o_ref.dtype)


# --------------------------------------------------------------------------- 2-D path
def _l1norm_rows_two_phase(x2d, block_byte_budget=BLOCK_BYTE_BUDGET):
    """Fallback for huge reduced dims: pass 1 accumulates |x| row sums over D tiles,
    pass 2 rescales. Costs one extra read of x but every block stays inside VMEM."""
    M, D = x2d.shape
    dsize = x2d.dtype.itemsize
    tm = M if M <= 8 else min(_round_up(M, 8), 256)
    td = max(128, (block_byte_budget // (tm * dsize)) // 128 * 128)
    td = min(td, _round_up(D, 128))
    m_tiles = pl.cdiv(M, tm)
    d_tiles = pl.cdiv(D, td)

    def norm_kernel(x_ref, n_ref, acc_ref):
        d = pl.program_id(1)

        @pl.when(d == 0)
        def _():
            acc_ref[...] = jnp.zeros_like(acc_ref)

        x = x_ref[...].astype(jnp.float32)
        # Mask lanes past D in the (possibly partial) last D tile: OOB reads are undefined.
        col = jax.lax.broadcasted_iota(jnp.int32, x.shape, 1) + d * td
        x = jnp.where(col < D, x, 0.0)
        acc_ref[...] += jnp.sum(jnp.abs(x), axis=-1, keepdims=True)

        @pl.when(d == pl.num_programs(1) - 1)
        def _():
            n_ref[...] = acc_ref[...] + EPS

    norms = pl.pallas_call(
        norm_kernel,
        out_shape=jax.ShapeDtypeStruct((M, 1), jnp.float32),
        grid_spec=pltpu.PrefetchScalarGridSpec(
            num_scalar_prefetch=0,
            grid=(m_tiles, d_tiles),
            in_specs=[pl.BlockSpec((tm, td), lambda m, d: (m, d))],
            out_specs=pl.BlockSpec((tm, 1), lambda m, d: (m, 0)),
            scratch_shapes=[pltpu.VMEM((tm, 1), jnp.float32)],
        ),
        compiler_params=_params(("parallel", "arbitrary")),
    )(x2d)

    def scale_kernel(x_ref, n_ref, o_ref):
        x = x_ref[...].astype(jnp.float32)
        o_ref[...] = (x * pl.reciprocal(n_ref[...], approx=False)).astype(o_ref.dtype)

    return pl.pallas_call(
        scale_kernel,
        out_shape=jax.ShapeDtypeStruct((M, D), x2d.dtype),
        grid_spec=pltpu.PrefetchScalarGridSpec(
            num_scalar_prefetch=0,
            grid=(m_tiles, d_tiles),
            in_specs=[pl.BlockSpec((tm, td), lambda m, d: (m, d)),
                      pl.BlockSpec((tm, 1), lambda m, d: (m, 0))],
            out_specs=pl.BlockSpec((tm, td), lambda m, d: (m, d)),
        ),
        compiler_params=_params(("parallel", "parallel")),
    )(x2d, norms)


def _l1norm_rows(x2d, block_byte_budget=BLOCK_BYTE_BUDGET):
    """x / (sum(|x|, axis=1, keepdims=True) + eps) for a 2-D array (reduced axis on lanes)."""
    M, D = x2d.shape
    dsize = x2d.dtype.itemsize
    row_bytes = D * dsize

    # A full-D block even at the minimum 8-row height would blow the VMEM budget -> two-phase.
    if 8 * row_bytes > MAX_FULLDIM_BLOCK_BYTES:
        return _l1norm_rows_two_phase(x2d, block_byte_budget)

    if M <= 8:
        tm = M                                                  # block == full array dims
    else:
        budget_rows = max(8, (block_byte_budget // row_bytes) // 8 * 8)
        half_rows = _round_up(pl.cdiv(M, 2), 8)                 # >= 2 grid steps for v7x megacore
        tm = max(8, min(budget_rows, half_rows))

    grid = (pl.cdiv(M, tm),)
    return pl.pallas_call(
        _rows_kernel,
        out_shape=jax.ShapeDtypeStruct((M, D), x2d.dtype),
        grid_spec=pltpu.PrefetchScalarGridSpec(
            num_scalar_prefetch=0,
            grid=grid,
            in_specs=[pl.BlockSpec((tm, D), lambda m: (m, 0))],
            out_specs=pl.BlockSpec((tm, D), lambda m: (m, 0)),
        ),
        compiler_params=_params(("parallel",)),
    )(x2d)


# --------------------------------------------------------------------------- ND path
def _l1norm_channels_3d(x3d, block_byte_budget=BLOCK_BYTE_BUDGET):
    """x / (sum(|x|, axis=1, keepdims=True) + eps) for (B, C, S), keeping the native layout."""
    B, C, S = x3d.shape
    dsize = x3d.dtype.itemsize
    col_bytes = C * dsize

    if S <= 128:
        ts = S                                                  # block dim == full dim
    else:
        budget_cols = max(128, (block_byte_budget // col_bytes) // 128 * 128)
        ts = min(budget_cols, _round_up(S, 128))
        if B == 1 and ts >= S:
            ts = max(128, _round_up(pl.cdiv(S, 2), 128))        # >= 2 grid steps for v7x megacore

    grid = (B, pl.cdiv(S, ts))
    return pl.pallas_call(
        _channels_kernel,
        out_shape=jax.ShapeDtypeStruct((B, C, S), x3d.dtype),
        grid_spec=pltpu.PrefetchScalarGridSpec(
            num_scalar_prefetch=0,
            grid=grid,
            in_specs=[pl.BlockSpec((1, C, ts), lambda b, s: (b, 0, s))],
            out_specs=pl.BlockSpec((1, C, ts), lambda b, s: (b, 0, s)),
        ),
        compiler_params=_params(("parallel", "parallel")),
    )(x3d)


# --------------------------------------------------------------------------- public API
def l1norm(x):
    """Forward pass of L1Norm: x / (sum(|x|, dim=1) + eps), broadcast over dim 1.

    Note: the PyTorch module's `norm.expand_as(x)` relies on keepdim-style broadcasting of
    the dim-1 reduction; that intended semantics is implemented here.
    """
    if x.ndim < 2:
        raise ValueError("L1Norm reduces over dim 1; input must have at least 2 dims.")
    if x.ndim == 2:
        return _l1norm_rows(x)

    B, C = x.shape[0], x.shape[1]
    S = 1
    for d in x.shape[2:]:
        S *= d
    dsize = x.dtype.itemsize
    if C * min(128, max(S, 1)) * dsize > MAX_FULLDIM_BLOCK_BYTES:
        # Huge channel dim: a full-C block doesn't fit; use the transpose + D-tiled fallback.
        xt = jnp.moveaxis(x, 1, -1)
        shp = xt.shape
        y = _l1norm_rows(xt.reshape(-1, C))
        return jnp.moveaxis(y.reshape(shp), -1, 1)

    # Native layout: merge trailing spatial dims (free reshape), reduce over C inside the kernel.
    y3 = _l1norm_channels_3d(x.reshape(B, C, S))
    return y3.reshape(x.shape)


def _reference(x):
    x32 = x.astype(jnp.float32)
    return (x32 / (jnp.sum(jnp.abs(x32), axis=1, keepdims=True) + EPS)).astype(x.dtype)


if __name__ == "__main__":
    key = jax.random.PRNGKey(0)
    k1, k2, k3, k4, k5 = jax.random.split(key, 5)

    # 2-D descriptor-style input (batch=2, hidden=32): single full-array block.
    x_2d = jax.random.normal(k1, (2, 32), dtype=jnp.float32)
    y_2d = l1norm(x_2d)

    # Larger 2-D input: budget-sized row tiles, multi-step "parallel" grid.
    x_big = jax.random.normal(k2, (1024, 128), dtype=jnp.float32)
    y_big = l1norm(x_big)

    # 4-D NCHW input (batch=2, channels=4, spatial=16x16): native-layout channel-reduce path.
    x_4d = jax.random.normal(k3, (2, 4, 16, 16), dtype=jnp.float32)
    y_4d = l1norm(x_4d)

    # bf16 input: I/O stays bf16 in HBM, norm/reciprocal computed in f32.
    x_bf16 = jax.random.normal(k4, (2, 4, 16, 16), dtype=jnp.bfloat16)
    y_bf16 = l1norm(x_bf16)

    # Exercise the D-tiled two-phase fallback (ragged last D tile) with a tiny forced budget.
    x_wide = jax.random.normal(k5, (64, 500), dtype=jnp.float32)
    y_wide = _l1norm_rows_two_phase(x_wide, block_byte_budget=64 * 1024)

    jax.block_until_ready((y_2d, y_big, y_4d, y_bf16, y_wide))

    assert y_2d.shape == x_2d.shape and y_2d.dtype == x_2d.dtype
    assert y_big.shape == x_big.shape and y_big.dtype == x_big.dtype
    assert y_4d.shape == x_4d.shape and y_4d.dtype == x_4d.dtype
    assert y_bf16.shape == x_bf16.shape and y_bf16.dtype == x_bf16.dtype
    assert y_wide.shape == x_wide.shape and y_wide.dtype == x_wide.dtype

    assert jnp.allclose(y_2d, _reference(x_2d), rtol=1e-5, atol=1e-6)
    assert jnp.allclose(y_big, _reference(x_big), rtol=1e-5, atol=1e-6)
    assert jnp.allclose(y_4d, _reference(x_4d), rtol=1e-5, atol=1e-6)
    assert jnp.allclose(y_wide, _reference(x_wide), rtol=1e-5, atol=1e-6)
    assert jnp.allclose(y_bf16.astype(jnp.float32), _reference(x_bf16).astype(jnp.float32),
                        rtol=2e-2, atol=2e-2)

    print("KERNEL_OK")
</pallas_src>

<mosaic_0001>
module attributes {stable_mosaic.version = 11 : i64} {
  func.func @_rows_kernel(%arg0: i32, %arg1: memref<2x32xf32, #tpu.memory_space<vmem>>, %arg2: memref<2x32xf32, #tpu.memory_space<vmem>>) attributes {dimension_semantics = [#tpu.dimension_semantics<parallel>], iteration_bounds = array<i64: 1>, scalar_prefetch = 0 : i64, scratch_operands = 0 : i64, tpu.core_type = #tpu.core_type<tc>, window_params = [{transform_indices = @transform_0, window_bounds = array<i64: 2, 32>}, {transform_indices = @transform_1, window_bounds = array<i64: 2, 32>}]} {
    %c0 = arith.constant 0 : index
    %c0_0 = arith.constant 0 : index
    %0 = vector.load %arg1[%c0, %c0_0] : memref<2x32xf32, #tpu.memory_space<vmem>>, vector<2x32xf32>
    %1 = math.absf %0 : vector<2x32xf32>
    %cst = arith.constant dense<0.000000e+00> : vector<2xf32>
    %2 = vector.multi_reduction <add>, %1, %cst [1] : vector<2x32xf32> to vector<2xf32>
    %3 = vector.shape_cast %2 : vector<2xf32> to vector<2x1xf32>
    %cst_1 = arith.constant 1.000000e-10 : f32
    %4 = vector.broadcast %cst_1 : f32 to vector<2x1xf32>
    %5 = arith.addf %3, %4 : vector<2x1xf32>
    %6 = tpu.reciprocal %5 : vector<2x1xf32> -> vector<2x1xf32>
    %7 = vector.broadcast %6 : vector<2x1xf32> to vector<2x32xf32>
    %8 = arith.mulf %0, %7 : vector<2x32xf32>
    %c0_2 = arith.constant 0 : index
    %c0_3 = arith.constant 0 : index
    %9 = vector.load %arg2[%c0_2, %c0_3] : memref<2x32xf32, #tpu.memory_space<vmem>>, vector<2x32xf32>
    tpu.vector_store %arg2[%c0_2, %c0_3], %8 {strides = array<i32>} : memref<2x32xf32, #tpu.memory_space<vmem>>, vector<2x32xf32>,
    return
  }
  func.func @transform_0(%arg0: i32) -> (i32, i32) {
    %c0_i32 = arith.constant 0 : i32
    %c0_i32_0 = arith.constant 0 : i32
    return %arg0, %c0_i32 : i32, i32
  }
  func.func @transform_1(%arg0: i32) -> (i32, i32) {
    %c0_i32 = arith.constant 0 : i32
    %c0_i32_0 = arith.constant 0 : i32
    return %arg0, %c0_i32 : i32, i32
  }
}

</mosaic_0001>

<llo_original>
// kernel: tpu_custom_call.1
$region0: #{tpu_custom_call.1}
  #allocation0 [shape = 'u32[]', space=smem, size = 0x4, offset = 0x4, fixed_abs, tag = 'smem constant byte address 0x4 - core index']
  #allocation1 [shape = 'u32[144,128]{1,0:T(1,128)}', space=vmem, size = 0x12000, scoped, tag = 'internal scratch']
  %s0 = inlined_call_operand.hbm [shape: f32[2,32], index: 0, kind: input, shape index: {}]
  %s1 = inlined_call_operand.hbm [shape: f32[2,32], index: 1, kind: output, shape index: {}]
  %s2 = sld [smem:[#allocation0]]
  $region18: #{tpu_custom_call.1} parent=0
    _
  %s4 = ssub.s32 1, %s2
  %s5 = scalar_select 0, %s4, %s2
  $region1: #{tpu_custom_call.1} parent=0
    #allocation2 [shape = 'u8[1024]{0}', space=vmem, size = 0x400, scoped, tag = 'input window, operand 0, single buffered']
    #allocation3 [shape = 's32[1]{0}', space=sflag, size = 0x4, scoped, tag = 'scoped memory for tpu_custom_call.1']
    #allocation4 [shape = 's32[1]{0}', space=sflag, size = 0x4, scoped, tag = 'scoped memory for tpu_custom_call.1']
    #allocation5 [shape = 'u8[1024]{0}', space=vmem, size = 0x400, scoped, tag = 'output window, operand 0, single buffered']
    %6 = vsyncpa [#allocation3], 0
    %7 = vsyncpa [#allocation4], 0
    // Predicated region
    $region2: #{tpu_custom_call.1} parent=1 // pred_check
      _
    $region3: #{tpu_custom_call.1} parent=1 // pred_check_branch
      %9 = sbr.rel (0) target = $region5
    $region4: #{tpu_custom_call.1} parent=1 // pred_region
      %s11 = ssub.s32 32, 32
      %12 = vsyncadd [#allocation3], %s11
      %s14 = sshll.u32 [#allocation2], 4
      %s15 = int_to_ptr.vmem [resolvable:$true] %s14
      %17 = dma.hbm_to_vmem [thread:$0]  %s0, 32, %s15, [#allocation3]
    $region5: #{tpu_custom_call.1} parent=1 // pred_fallthru
      _
    // Predicated region
    $region6: #{tpu_custom_call.1} parent=1 // pred_check
      _
    $region7: #{tpu_custom_call.1} parent=1 // pred_check_branch
      %19 = sbr.rel (0) target = $region9
    $region8: #{tpu_custom_call.1} parent=1 // pred_region
      %20 = dma.done [#allocation3], 32
    $region9: #{tpu_custom_call.1} parent=1 // pred_fallthru
      _
    %v21 = vld [vmem:[#allocation2] sm:$0x3]
    %v22 = vand.u32 2147483647, %v21
    %vm23 = vcmask 254976
    %v24 = vsel %vm23, %v22, 0.0
    %25 = vadd.xlane.f32.xlu0 %v24
    %v26 = vpop.xlane.xlu0 %25
    %v27 = vadd.f32 %v26, 1e-10
    %v28 = vrcp.pop %v27
    %v29 = vmul.f32 %v21, %v28
    %30 = vst.msk [vmem:[#allocation5] sm:$0x3] %vm23, %v29
    // Predicated region
    $region10: #{tpu_custom_call.1} parent=1 // pred_check
      _
    $region11: #{tpu_custom_call.1} parent=1 // pred_check_branch
      %32 = sbr.rel (0) target = $region13
    $region12: #{tpu_custom_call.1} parent=1 // pred_region
      %s34 = ssub.s32 32, 32
      %35 = vsyncadd [#allocation4], %s34
      %s37 = sshll.u32 [#allocation5], 4
      %s38 = int_to_ptr.vmem [resolvable:$true] %s37
      %40 = dma.vmem_to_hbm [thread:$0]  %s38, 32, %s1, [#allocation4]
    $region13: #{tpu_custom_call.1} parent=1 // pred_fallthru
      _
    // Predicated region
    $region14: #{tpu_custom_call.1} parent=1 // pred_check
      _
    $region15: #{tpu_custom_call.1} parent=1 // pred_check_branch
      %42 = sbr.rel (0) target = $region17
    $region16: #{tpu_custom_call.1} parent=1 // pred_region
      %43 = dma.done [#allocation4], 32
    $region17: #{tpu_custom_call.1} parent=1 // pred_fallthru
      _
    %44 = vsyncpa [#allocation3], 1
    %45 = vsyncpa [#allocation4], 1

</llo_original>
